<compile_context>
chip_gen: v7x
topology: tpu7x:2x2x1
jax: 0.10.0
libtpu: 0.0.40
codegen_flags: <defaults>
</compile_context>

<pallas_src>
import math

import jax
import jax.numpy as jnp
from jax.experimental import pallas as pl
from jax.experimental.pallas import tpu as pltpu


def _round_up(v, m):
    return ((v + m - 1) // m) * m


def mlp_kernel(x_ref, w1_ref, b1_ref, w2_ref, b2_ref, o_ref):
    """Grid = (M tiles, hidden tiles).  The output block index is (i, 0),
    constant across the hidden axis, so o_ref stays VMEM-resident and serves
    as the f32 accumulator (no scratch needed).

      k == 0 : o = broadcast(b2)
      each k : h_k = tanh(x @ W1[:, k] + b1[k]);  o += h_k @ W2[k, :]
    """
    k = pl.program_id(1)

    @pl.when(k == 0)
    def _init():
        o_ref[...] = jnp.broadcast_to(b2_ref[...], o_ref.shape)

    # fc1 slab: [tm, f_in_p] @ [f_in_p, th] -> f32 (MXU).
    h = jnp.dot(x_ref[...], w1_ref[...], preferred_element_type=jnp.float32)
    # Bias add + tanh in f32 (VPU + EUP; v5e has no bf16 VPU/EUP path).
    h = jnp.tanh(h + b1_ref[...])
    # fc2 partial: [tm, th] @ [th, f_out_p]; accumulate directly in o_ref (f32).
    o_ref[...] += jnp.dot(h.astype(w2_ref.dtype), w2_ref[...],
                          preferred_element_type=jnp.float32)


def prepare_mlp_params(w1, b1, w2, b2):
    """Pad weights/biases ONCE (not per forward call).  Lane dims -> x128.
    Zero padding is numerically exact: padded x / W1 columns multiply zeros,
    padded hidden rows of W2 are zero so tanh(0 + 0) contributes nothing, and
    padded f_out columns are sliced off after the kernel."""
    f_in, hidden = w1.shape
    hidden2, f_out = w2.shape
    assert hidden == hidden2
    f_in_p = _round_up(f_in, 128)
    hid_p = _round_up(hidden, 128)
    f_out_p = _round_up(f_out, 128)
    w1p = jnp.pad(w1, ((0, f_in_p - f_in), (0, hid_p - hidden)))
    b1p = jnp.pad(jnp.reshape(b1, (1, -1)), ((0, 0), (0, hid_p - hidden)))
    w2p = jnp.pad(w2, ((0, hid_p - hidden), (0, f_out_p - f_out)))
    b2p = jnp.pad(jnp.reshape(b2, (1, -1)), ((0, 0), (0, f_out_p - f_out)))
    return dict(w1=w1p, b1=b1p, w2=w2p, b2=b2p,
                f_in=f_in, f_out=f_out, hidden=hidden)


# Conservative per-step VMEM budget (bytes) that holds on all generations;
# v7x's scoped default (32 MiB of 64 MiB physical) is the binding constraint.
_VMEM_BUDGET = 24 * 1024 * 1024
_VMEM_LIMIT = 32 * 1024 * 1024


def mlp_forward(x, params, *, tm_max=512):
    """x: [B, f_in] f32; params from prepare_mlp_params.  Returns [B, f_out] f32."""
    w1p, b1p, w2p, b2p = params["w1"], params["b1"], params["w2"], params["b2"]
    f_in, f_out = params["f_in"], params["f_out"]

    B = x.shape[0]
    f_in_p, hid_p = w1p.shape
    _, f_out_p = w2p.shape

    # ---- M tile: as large as the batch allows (amortizes any weight-slab
    # re-streaming), but keep >= 2 M tiles when possible so the "parallel"
    # axis shards across both v7x TensorCores.
    tm = min(tm_max, _round_up(B, 8))
    if B > 8 and _round_up(B, tm) // tm < 2:
        tm = _round_up((B + 1) // 2, 8)
    B_p = _round_up(B, tm)

    # ---- hidden tile: keep the full padded weights VMEM-resident when they
    # fit (block index constant -> loaded once); otherwise pick the largest
    # multiple-of-128 tile that divides hid_p and fits the budget.
    def footprint(th):
        return 4 * (2 * tm * f_in_p                       # x tile (double-buffered)
                    + 2 * (f_in_p * th + th * f_out_p)     # W1/W2 slabs (double-buffered)
                    + tm * f_out_p                         # resident out/accumulator tile
                    + 2 * (th + f_out_p))                  # biases

    if footprint(hid_p) <= _VMEM_BUDGET:
        th = hid_p                                         # weights fully resident
    else:
        th = 128
        for cand in range(hid_p - 128, 127, -128):
            if hid_p % cand == 0 and footprint(cand) <= _VMEM_BUDGET:
                th = cand
                break
    # TODO(synk): for very wide f_out, add a third grid axis over f_out
    # (reduction still last) once th*f_out_p and tm*f_out_p approach the budget.

    # Only pad x per call (weights were padded once at prep time).
    if (B_p, f_in_p) != x.shape:
        xp = jnp.pad(x, ((0, B_p - B), (0, f_in_p - f_in)))
    else:
        xp = x

    m_tiles = B_p // tm
    hid_tiles = hid_p // th
    grid = (m_tiles, hid_tiles)

    flops = 2 * B_p * f_in_p * hid_p + 2 * B_p * hid_p * f_out_p
    weight_reads = 1 if hid_tiles == 1 else m_tiles
    bytes_accessed = 4 * (xp.size
                          + weight_reads * (w1p.size + w2p.size
                                            + b1p.size + b2p.size)
                          + B_p * f_out_p)
    cost = pl.CostEstimate(flops=flops,
                           transcendentals=B_p * hid_p,
                           bytes_accessed=bytes_accessed)

    out_p = pl.pallas_call(
        mlp_kernel,
        out_shape=jax.ShapeDtypeStruct((B_p, f_out_p), jnp.float32),
        grid_spec=pltpu.PrefetchScalarGridSpec(
            num_scalar_prefetch=0,
            grid=grid,
            in_specs=[
                pl.BlockSpec((tm, f_in_p), lambda i, k: (i, 0)),    # x M-tile
                pl.BlockSpec((f_in_p, th), lambda i, k: (0, k)),    # W1 col-slab
                pl.BlockSpec((1, th), lambda i, k: (0, k)),         # b1 slice
                pl.BlockSpec((th, f_out_p), lambda i, k: (k, 0)),   # W2 row-slab
                pl.BlockSpec((1, f_out_p), lambda i, k: (0, 0)),    # b2
            ],
            out_specs=pl.BlockSpec((tm, f_out_p), lambda i, k: (i, 0)),
        ),
        compiler_params=pltpu.CompilerParams(
            dimension_semantics=("parallel", "arbitrary"),
            vmem_limit_bytes=_VMEM_LIMIT,
        ),
        cost_estimate=cost,
    )(xp, w1p, b1p, w2p, b2p)

    if (B_p, f_out_p) != (B, f_out):
        return out_p[:B, :f_out]
    return out_p


def init_linear_params(key, fan_in, fan_out):
    """torch.nn.Linear default init: U(-1/sqrt(fan_in), 1/sqrt(fan_in)).
    Weight returned pre-transposed as [fan_in, fan_out]."""
    kw, kb = jax.random.split(key)
    bound = 1.0 / math.sqrt(fan_in)
    w = jax.random.uniform(kw, (fan_in, fan_out), jnp.float32, -bound, bound)
    b = jax.random.uniform(kb, (1, fan_out), jnp.float32, -bound, bound)
    return w, b


if __name__ == "__main__":
    # fc1 = Linear(f_in, 4*f_in), fc2 = Linear(4*f_in, f_out).
    B, f_in, f_out = 256, 64, 16
    hidden = 4 * f_in

    key = jax.random.PRNGKey(0)
    kx, k1, k2 = jax.random.split(key, 3)

    x = jax.random.normal(kx, (B, f_in), jnp.float32)
    w1, b1 = init_linear_params(k1, f_in, hidden)
    w2, b2 = init_linear_params(k2, hidden, f_out)

    params = prepare_mlp_params(w1, b1, w2, b2)

    out = mlp_forward(x, params)
    out = jax.block_until_ready(out)

    # Reference: fc2(tanh(fc1(x))) in plain JAX.
    ref = jnp.tanh(x @ w1 + b1) @ w2 + b2
    assert out.shape == (B, f_out)
    assert jnp.allclose(out, ref, atol=1e-4, rtol=1e-5), float(
        jnp.max(jnp.abs(out - ref)))

    print("KERNEL_OK")
</pallas_src>

<mosaic_0001>
module attributes {stable_mosaic.version = 11 : i64} {
  func.func @mlp_kernel(%arg0: i32, %arg1: i32, %arg2: memref<128x128xf32, #tpu.memory_space<vmem>>, %arg3: memref<128x256xf32, #tpu.memory_space<vmem>>, %arg4: memref<1x256xf32, #tpu.memory_space<vmem>>, %arg5: memref<256x128xf32, #tpu.memory_space<vmem>>, %arg6: memref<1x128xf32, #tpu.memory_space<vmem>>, %arg7: memref<128x128xf32, #tpu.memory_space<vmem>>) attributes {dimension_semantics = [#tpu.dimension_semantics<parallel>, #tpu.dimension_semantics<arbitrary>], iteration_bounds = array<i64: 2, 1>, scalar_prefetch = 0 : i64, scratch_operands = 0 : i64, tpu.core_type = #tpu.core_type<tc>, window_params = [{transform_indices = @transform_0, window_bounds = array<i64: 128, 128>}, {transform_indices = @transform_1, window_bounds = array<i64: 128, 256>}, {transform_indices = @transform_2, window_bounds = array<i64: 1, 256>}, {transform_indices = @transform_3, window_bounds = array<i64: 256, 128>}, {pipeline_mode = #tpu.pipeline_mode<synchronous>, transform_indices = @transform_4, window_bounds = array<i64: 1, 128>}, {transform_indices = @transform_5, window_bounds = array<i64: 128, 128>}]} {
    %c0_i32 = arith.constant 0 : i32
    %0 = arith.cmpi eq, %arg1, %c0_i32 : i32
    %1 = arith.extui %0 : i1 to i32
    %c0_i32_0 = arith.constant 0 : i32
    %2 = arith.cmpi ne, %1, %c0_i32_0 : i32
    scf.if %2 {
      %c0_13 = arith.constant 0 : index
      %c0_14 = arith.constant 0 : index
      %15 = vector.load %arg6[%c0_13, %c0_14] : memref<1x128xf32, #tpu.memory_space<vmem>>, vector<1x128xf32>
      %16 = vector.shape_cast %15 : vector<1x128xf32> to vector<1x128xf32>
      %17 = vector.broadcast %16 : vector<1x128xf32> to vector<128x128xf32>
      %c0_15 = arith.constant 0 : index
      %c0_16 = arith.constant 0 : index
      %18 = vector.load %arg7[%c0_15, %c0_16] : memref<128x128xf32, #tpu.memory_space<vmem>>, vector<128x128xf32>
      tpu.vector_store %arg7[%c0_15, %c0_16], %17 {strides = array<i32>} : memref<128x128xf32, #tpu.memory_space<vmem>>, vector<128x128xf32>,
    } else {
    }
    %c0 = arith.constant 0 : index
    %c0_1 = arith.constant 0 : index
    %3 = vector.load %arg2[%c0, %c0_1] : memref<128x128xf32, #tpu.memory_space<vmem>>, vector<128x128xf32>
    %c0_2 = arith.constant 0 : index
    %c0_3 = arith.constant 0 : index
    %4 = vector.load %arg3[%c0_2, %c0_3] : memref<128x256xf32, #tpu.memory_space<vmem>>, vector<128x256xf32>
    %cst = arith.constant dense<0.000000e+00> : vector<128x256xf32>
    %5 = tpu.matmul %3, %4, %cst {dimension_numbers = #tpu.dot_dimension_numbers<[1], [0], [0], [1], [0, 0, 1, 1], [], []>} : vector<128x128xf32>, vector<128x256xf32>, vector<128x256xf32> -> vector<128x256xf32>
    %c0_4 = arith.constant 0 : index
    %c0_5 = arith.constant 0 : index
    %6 = vector.load %arg4[%c0_4, %c0_5] : memref<1x256xf32, #tpu.memory_space<vmem>>, vector<1x256xf32>
    %7 = vector.broadcast %6 : vector<1x256xf32> to vector<128x256xf32>
    %8 = arith.addf %5, %7 : vector<128x256xf32>
    %9 = math.tanh %8 : vector<128x256xf32>
    %c0_6 = arith.constant 0 : index
    %c0_7 = arith.constant 0 : index
    %10 = vector.load %arg7[%c0_6, %c0_7] : memref<128x128xf32, #tpu.memory_space<vmem>>, vector<128x128xf32>
    %c0_8 = arith.constant 0 : index
    %c0_9 = arith.constant 0 : index
    %11 = vector.load %arg5[%c0_8, %c0_9] : memref<256x128xf32, #tpu.memory_space<vmem>>, vector<256x128xf32>
    %cst_10 = arith.constant dense<0.000000e+00> : vector<128x128xf32>
    %12 = tpu.matmul %9, %11, %cst_10 {dimension_numbers = #tpu.dot_dimension_numbers<[1], [0], [0], [1], [0, 0, 1, 1], [], []>} : vector<128x256xf32>, vector<256x128xf32>, vector<128x128xf32> -> vector<128x128xf32>
    %13 = arith.addf %10, %12 : vector<128x128xf32>
    %c0_11 = arith.constant 0 : index
    %c0_12 = arith.constant 0 : index
    %14 = vector.load %arg7[%c0_11, %c0_12] : memref<128x128xf32, #tpu.memory_space<vmem>>, vector<128x128xf32>
    tpu.vector_store %arg7[%c0_11, %c0_12], %13 {strides = array<i32>} : memref<128x128xf32, #tpu.memory_space<vmem>>, vector<128x128xf32>,
    return
  }
  func.func @transform_0(%arg0: i32, %arg1: i32) -> (i32, i32) {
    %c0_i32 = arith.constant 0 : i32
    %c0_i32_0 = arith.constant 0 : i32
    return %arg0, %c0_i32 : i32, i32
  }
  func.func @transform_1(%arg0: i32, %arg1: i32) -> (i32, i32) {
    %c0_i32 = arith.constant 0 : i32
    %c0_i32_0 = arith.constant 0 : i32
    return %c0_i32, %arg1 : i32, i32
  }
  func.func @transform_2(%arg0: i32, %arg1: i32) -> (i32, i32) {
    %c0_i32 = arith.constant 0 : i32
    %c0_i32_0 = arith.constant 0 : i32
    return %c0_i32, %arg1 : i32, i32
  }
  func.func @transform_3(%arg0: i32, %arg1: i32) -> (i32, i32) {
    %c0_i32 = arith.constant 0 : i32
    %c0_i32_0 = arith.constant 0 : i32
    return %arg1, %c0_i32 : i32, i32
  }
  func.func @transform_4(%arg0: i32, %arg1: i32) -> (i32, i32) {
    %c0_i32 = arith.constant 0 : i32
    %c0_i32_0 = arith.constant 0 : i32
    %c0_i32_1 = arith.constant 0 : i32
    return %c0_i32, %c0_i32_0 : i32, i32
  }
  func.func @transform_5(%arg0: i32, %arg1: i32) -> (i32, i32) {
    %c0_i32 = arith.constant 0 : i32
    %c0_i32_0 = arith.constant 0 : i32
    return %arg0, %c0_i32 : i32, i32
  }
}

</mosaic_0001>

<llo_original>
// kernel: tpu_custom_call.1
$region0: #{tpu_custom_call.1}
  #allocation0 [shape = 'u32[]', space=smem, size = 0x4, offset = 0x4, fixed_abs, tag = 'smem constant byte address 0x4 - core index']
  #allocation1 [shape = 'u32[144,128]{1,0:T(1,128)}', space=vmem, size = 0x12000, scoped, tag = 'internal scratch']
  %s0 = inlined_call_operand.hbm [shape: f32[256,128], index: 0, kind: input, shape index: {}]
  %s1 = inlined_call_operand.hbm [shape: f32[128,256], index: 1, kind: input, shape index: {}]
  %s2 = inlined_call_operand.vmem [shape: f32[1,256], index: 2, kind: input, shape index: {}]
  %s3 = inlined_call_operand.hbm [shape: f32[256,128], index: 3, kind: input, shape index: {}]
  %s4 = inlined_call_operand.vmem [shape: f32[1,128], index: 4, kind: input, shape index: {}]
  %s5 = inlined_call_operand.hbm [shape: f32[256,128], index: 5, kind: output, shape index: {}]
  %s6 = sld [smem:[#allocation0]]
  $region69: #{tpu_custom_call.1} parent=0
    _
  %s8 = ssub.s32 1, %s6
  %s9 = scalar_select 0, %s8, %s6
  $region1: #{tpu_custom_call.1} parent=0
    #allocation2 [shape = 'u8[131072]{0}', space=vmem, size = 0x20000, scoped, tag = 'input window, operand 0']
    #allocation3 [shape = 's32[2]{0}', space=sflag, size = 0x8, scoped, tag = 'scoped memory for tpu_custom_call.1']
    #allocation4 [shape = 's32[2]{0}', space=sflag, size = 0x8, scoped, tag = 'scoped memory for tpu_custom_call.1']
    #allocation5 [shape = 'u8[131072]{0}', space=vmem, size = 0x20000, scoped, tag = 'input window, operand 1, single buffered']
    #allocation6 [shape = 's32[1]{0}', space=sflag, size = 0x4, scoped, tag = 'scoped memory for tpu_custom_call.1']
    #allocation7 [shape = 'u8[131072]{0}', space=vmem, size = 0x20000, scoped, tag = 'input window, operand 3, single buffered']
    #allocation8 [shape = 'u8[131072]{0}', space=vmem, size = 0x20000, scoped, tag = 'output window, operand 0']
    %10 = vsyncpa [#allocation3], 0
    %s11 = scalar_lea.sflag [#allocation3], 1
    %12 = vsyncpa %s11, 0
    %13 = vsyncpa [#allocation6], 0
    %14 = vsyncpa [#allocation4], 0
    %s15 = scalar_lea.sflag [#allocation4], 1
    %16 = vsyncpa %s15, 0
    loop: start=0, step=1, limit=4
    $region2: #{tpu_custom_call.1} parent=1 // loop_pre_header
      _
    $region3: #{tpu_custom_call.1} parent=1 // loop_header
      %s18 = sphi 0, %s22
      %p19 = scmp.ge.s32.totalorder %s18, 4
      %s25 = sphi 0, %s37
      %s26 = sphi 0, %s33
      %s27 = sphi 0, %s25
      %s28 = sphi 0, %s26
      %s29 = sphi 0, %s27
      %s30 = sphi 0, %s28
      %s40 = sphi 0, %s42
      %s43 = sphi 0, %s40
      %s44 = sphi 0, %s43
      %s60 = sphi 0, %s44
      %s66 = sphi 0, %s68
      %s69 = sphi 0, %s66
      %s70 = sphi 0, %s69
      %s86 = sphi 0, %s70
      %s92 = sphi 0, %s94
      %s95 = sphi 0, %s92
      %s96 = sphi 0, %s95
      %s112 = sphi 0, %s96
      %s118 = sphi 0, %s120
      %s121 = sphi 0, %s118
      %s122 = sphi 0, %s121
      %s138 = sphi 0, %s122
      %s142 = sphi 0, %s142
      %s144 = sphi 0, %s142
      %s145 = sphi 0, %s144
      %s159 = sphi 0, %s145
      %s165 = sphi 0, %s167
      %s168 = sphi 0, %s165
      %s169 = sphi 0, %s168
      %s185 = sphi 0, %s169
    $region4: #{tpu_custom_call.1} parent=1 // loop_header_branch
      %21 = sbr.rel (%p19) target = $region8
    $region5: #{tpu_custom_call.1} parent=1 // loop_body
      %s23 = ssub.s32 %s18, 1
      %s24 = ssub.s32 %s18, 2
      %s31 = sadd.s32 1, %s26
      %p32 = scmp.ge.s32.totalorder %s31, 1
      %s33 = scalar_select %p32, 0, %s31
      %s34 = sadd.s32 1, %s25
      %s35 = scalar_select %p32, %s34, %s25
      %p36 = scmp.ge.s32.totalorder %s35, 2
      %s37 = scalar_select %p36, 0, %s35
      %s38 = ssub.s32 %s25, %s37
      %p39 = scmp.eq.s32.totalorder %s38, 0
      %s41 = sadd.s32 %s40, 1
      %s42 = scalar_select %p39, %s40, %s41
      %p45 = pneg %p39
      %p46 = scmp.eq.s32.totalorder %s18, 1
      %p47 = por %p45, %p46
      %p48 = scmp.ne.s32.totalorder %s40, %s43
      %p49 = scmp.eq.s32.totalorder %s18, 0
      %p50 = por %p48, %p49
      %p51 = scmp.ne.s32.totalorder %s40, %s43
      %p52 = scmp.eq.s32.totalorder %s23, 1
      %p53 = por %p51, %p52
      %p54 = scmp.ne.s32.totalorder %s43, %s44
      %p55 = scmp.eq.s32.totalorder %s23, 0
      %p56 = por %p54, %p55
      %p57 = scmp.ne.s32.totalorder %s43, %s44
      %p58 = scmp.eq.s32.totalorder %s24, 1
      %p59 = por %p57, %p58
      %p61 = scmp.ne.s32.totalorder %s44, %s60
      %p62 = scmp.eq.s32.totalorder %s24, 0
      %p63 = por %p61, %p62
      %s64 = ssub.s32 %s26, %s33
      %p65 = scmp.eq.s32.totalorder %s64, 0
      %s67 = sadd.s32 %s66, 1
      %s68 = scalar_select %p65, %s66, %s67
      %p71 = pneg %p65
      %p72 = scmp.eq.s32.totalorder %s18, 1
      %p73 = por %p71, %p72
      %p74 = scmp.ne.s32.totalorder %s66, %s69
      %p75 = scmp.eq.s32.totalorder %s18, 0
      %p76 = por %p74, %p75
      %p77 = scmp.ne.s32.totalorder %s66, %s69
      %p78 = scmp.eq.s32.totalorder %s23, 1
      %p79 = por %p77, %p78
      %p80 = scmp.ne.s32.totalorder %s69, %s70
      %p81 = scmp.eq.s32.totalorder %s23, 0
      %p82 = por %p80, %p81
      %p83 = scmp.ne.s32.totalorder %s69, %s70
      %p84 = scmp.eq.s32.totalorder %s24, 1
      %p85 = por %p83, %p84
      %p87 = scmp.ne.s32.totalorder %s70, %s86
      %p88 = scmp.eq.s32.totalorder %s24, 0
      %p89 = por %p87, %p88
      %s90 = ssub.s32 %s26, %s33
      %p91 = scmp.eq.s32.totalorder %s90, 0
      %s93 = sadd.s32 %s92, 1
      %s94 = scalar_select %p91, %s92, %s93
      %p97 = pneg %p91
      %p98 = scmp.eq.s32.totalorder %s18, 1
      %p99 = por %p97, %p98
      %p100 = scmp.ne.s32.totalorder %s92, %s95
      %p101 = scmp.eq.s32.totalorder %s18, 0
      %p102 = por %p100, %p101
      %p103 = scmp.ne.s32.totalorder %s92, %s95
      %p104 = scmp.eq.s32.totalorder %s23, 1
      %p105 = por %p103, %p104
      %p106 = scmp.ne.s32.totalorder %s95, %s96
      %p107 = scmp.eq.s32.totalorder %s23, 0
      %p108 = por %p106, %p107
      %p109 = scmp.ne.s32.totalorder %s95, %s96
      %p110 = scmp.eq.s32.totalorder %s24, 1
      %p111 = por %p109, %p110
      %p113 = scmp.ne.s32.totalorder %s96, %s112
      %p114 = scmp.eq.s32.totalorder %s24, 0
      %p115 = por %p113, %p114
      %s116 = ssub.s32 %s26, %s33
      %p117 = scmp.eq.s32.totalorder %s116, 0
      %s119 = sadd.s32 %s118, 1
      %s120 = scalar_select %p117, %s118, %s119
      %p123 = pneg %p117
      %p124 = scmp.eq.s32.totalorder %s18, 1
      %p125 = por %p123, %p124
      %p126 = scmp.ne.s32.totalorder %s118, %s121
      %p127 = scmp.eq.s32.totalorder %s18, 0
      %p128 = por %p126, %p127
      %p129 = scmp.ne.s32.totalorder %s118, %s121
      %p130 = scmp.eq.s32.totalorder %s23, 1
      %p131 = por %p129, %p130
      %p132 = scmp.ne.s32.totalorder %s121, %s122
      %p133 = scmp.eq.s32.totalorder %s23, 0
      %p134 = por %p132, %p133
      %p135 = scmp.ne.s32.totalorder %s121, %s122
      %p136 = scmp.eq.s32.totalorder %s24, 1
      %p137 = por %p135, %p136
      %p139 = scmp.ne.s32.totalorder %s122, %s138
      %p140 = scmp.eq.s32.totalorder %s24, 0
      %p141 = por %p139, %p140
      %s143 = sadd.s32 %s142, 1
      %p146 = scmp.eq.s32.totalorder %s18, 1
      %p147 = scmp.ne.s32.totalorder %s142, %s144
      %p148 = scmp.eq.s32.totalorder %s18, 0
      %p149 = por %p147, %p148
      %p150 = scmp.ne.s32.totalorder %s142, %s144
      %p151 = scmp.eq.s32.totalorder %s23, 1
      %p152 = por %p150, %p151
      %p153 = scmp.ne.s32.totalorder %s144, %s145
      %p154 = scmp.eq.s32.totalorder %s23, 0
      %p155 = por %p153, %p154
      %p156 = scmp.ne.s32.totalorder %s144, %s145
      %p157 = scmp.eq.s32.totalorder %s24, 1
      %p158 = por %p156, %p157
      %p160 = scmp.ne.s32.totalorder %s145, %s159
      %p161 = scmp.eq.s32.totalorder %s24, 0
      %p162 = por %p160, %p161
      %s163 = ssub.s32 %s25, %s37
      %p164 = scmp.eq.s32.totalorder %s163, 0
      %s166 = sadd.s32 %s165, 1
      %s167 = scalar_select %p164, %s165, %s166
      %p170 = pneg %p164
      %p171 = scmp.eq.s32.totalorder %s18, 1
      %p172 = por %p170, %p171
      %p173 = scmp.ne.s32.totalorder %s165, %s168
      %p174 = scmp.eq.s32.totalorder %s18, 0
      %p175 = por %p173, %p174
      %p176 = scmp.ne.s32.totalorder %s165, %s168
      %p177 = scmp.eq.s32.totalorder %s23, 1
      %p178 = por %p176, %p177
      %p179 = scmp.ne.s32.totalorder %s168, %s169
      %p180 = scmp.eq.s32.totalorder %s23, 0
      %p181 = por %p179, %p180
      %p182 = scmp.ne.s32.totalorder %s168, %s169
      %p183 = scmp.eq.s32.totalorder %s24, 1
      %p184 = por %p182, %p183
      %p186 = scmp.ne.s32.totalorder %s169, %s185
      %p187 = scmp.eq.s32.totalorder %s24, 0
      %p188 = por %p186, %p187
      %p189 = scmp.le.s32.totalorder 1, %s18
      %p190 = scmp.lt.s32.totalorder %s18, 3
      %p191 = pnand %p189, %p190
      %p192 = pneg %p191
      // Predicated region
      $region9: #{tpu_custom_call.1} parent=5 // pred_check
        _
      $region10: #{tpu_custom_call.1} parent=5 // pred_check_branch
        %194 = sbr.rel (%p191) target = $region12
      $region11: #{tpu_custom_call.1} parent=5 // pred_region
        %s195 = ssub.s32 %s18, 1
        // Predicated region
        $region13: #{tpu_custom_call.1} parent=11 // pred_check
          %p196 = pneg %p82
        $region14: #{tpu_custom_call.1} parent=11 // pred_check_branch
          %198 = sbr.rel (%p196) target = $region16
        $region15: #{tpu_custom_call.1} parent=11 // pred_region
          %s199 = smul.u32 2, %s28
          %s201 = ssub.s32 4096, 4096
          %202 = vsyncadd [#allocation6], %s201
          %s203 = smul.addr %s199, 128
          %s204 = scalar_lea.hbm %s1, %s203
          %s205 = sshll.u32 [#allocation5], 4
          %s206 = int_to_ptr.vmem [resolvable:$true] %s205
          %211 = dma.hbm_to_vmem [thread:$0]  %s204, 4096, %s206, [#allocation6], 256, 256, 16
        $region16: #{tpu_custom_call.1} parent=11 // pred_fallthru
          _
        // Predicated region
        $region17: #{tpu_custom_call.1} parent=11 // pred_check
          %p212 = pneg %p108
        $region18: #{tpu_custom_call.1} parent=11 // pred_check_branch
          %214 = sbr.rel (%p212) target = $region20
        $region19: #{tpu_custom_call.1} parent=11 // pred_region
          %s215 = smul.u32 2, %s28
          %p216 = scmp.lt.s32.totalorder %s215, 1
          %s217 = scalar_select %p216, %s215, 1
          %s218 = scalar_lea.vmem %s2, %s217
          %s219 = smul.u32 2, %s28
        $region20: #{tpu_custom_call.1} parent=11 // pred_fallthru
          _
        // Predicated region
        $region21: #{tpu_custom_call.1} parent=11 // pred_check
          %p220 = pneg %p134
        $region22: #{tpu_custom_call.1} parent=11 // pred_check_branch
          %222 = sbr.rel (%p220) target = $region24
        $region23: #{tpu_custom_call.1} parent=11 // pred_region
          %s223 = smul.u32 32, %s28
          %s225 = ssub.s32 4096, 4096
          %226 = vsyncadd [#allocation6], %s225
          %s227 = smul.addr %s223, 128
          %s228 = scalar_lea.hbm %s3, %s227
          %s229 = sshll.u32 [#allocation7], 4
          %s230 = int_to_ptr.vmem [resolvable:$true] %s229
          %235 = dma.hbm_to_vmem [thread:$0]  %s228, 4096, %s230, [#allocation6], 128, 128, 8
        $region24: #{tpu_custom_call.1} parent=11 // pred_fallthru
          _
        // Predicated region
        $region25: #{tpu_custom_call.1} parent=11 // pred_check
          %p236 = pneg %p155
        $region26: #{tpu_custom_call.1} parent=11 // pred_check_branch
          %238 = sbr.rel (%p236) target = $region28
        $region27: #{tpu_custom_call.1} parent=11 // pred_region
          _
        $region28: #{tpu_custom_call.1} parent=11 // pred_fallthru
          _
      $region12: #{tpu_custom_call.1} parent=5 // pred_fallthru
        _
      %p239 = scmp.lt.s32.totalorder %s18, 2
      // Predicated region
      $region29: #{tpu_custom_call.1} parent=5 // pred_check
        %p240 = pneg %p239
      $region30: #{tpu_custom_call.1} parent=5 // pred_check_branch
        %242 = sbr.rel (%p240) target = $region32
      $region31: #{tpu_custom_call.1} parent=5 // pred_region
        // Predicated region
        $region33: #{tpu_custom_call.1} parent=31 // pred_check
          %p243 = pneg %p50
        $region34: #{tpu_custom_call.1} parent=31 // pred_check_branch
          %245 = sbr.rel (%p243) target = $region36
        $region35: #{tpu_custom_call.1} parent=31 // pred_region
          %s246 = sand.u32 %s40, 1
          %s247 = scalar_lea.sflag [#allocation3], %s246
          %s248 = sand.u32 %s40, 1
          %s249 = smul.addr %s248, 128
          %s250 = scalar_lea.vmem [#allocation2], %s249
          %s251 = smul.u32 16, %s25
          %s253 = ssub.s32 2048, 2048
          %254 = vsyncadd %s247, %s253
          %s255 = smul.addr %s251, 128
          %s256 = scalar_lea.hbm %s0, %s255
          %s257 = sshll.u32 %s250, 4
          %s258 = int_to_ptr.vmem [resolvable:$true] %s257
          %263 = dma.hbm_to_vmem [thread:$0]  %s256, 2048, %s258, %s247, 128, 128, 8
        $region36: #{tpu_custom_call.1} parent=31 // pred_fallthru
          _
      $region32: #{tpu_custom_call.1} parent=5 // pred_fallthru
        _
      %p264 = scmp.le.s32.totalorder 1, %s18
      %p265 = scmp.lt.s32.totalorder %s18, 3
      %p266 = pnand %p264, %p265
      %p267 = pneg %p266
      // Predicated region
      $region37: #{tpu_custom_call.1} parent=5 // pred_check
        _
      $region38: #{tpu_custom_call.1} parent=5 // pred_check_branch
        %269 = sbr.rel (%p266) target = $region40
      $region39: #{tpu_custom_call.1} parent=5 // pred_region
        %s270 = ssub.s32 %s18, 1
        %s271 = sand.u32 %s43, 1
        %s272 = scalar_lea.sflag [#allocation3], %s271
        %s273 = sand.u32 %s43, 1
        %s274 = smul.addr %s273, 128
        %s275 = scalar_lea.vmem [#allocation2], %s274
        // Predicated region
        $region41: #{tpu_custom_call.1} parent=39 // pred_check
          %p276 = pneg %p56
        $region42: #{tpu_custom_call.1} parent=39 // pred_check_branch
          %278 = sbr.rel (%p276) target = $region44
        $region43: #{tpu_custom_call.1} parent=39 // pred_region
          %279 = dma.done %s272, 2048
        $region44: #{tpu_custom_call.1} parent=39 // pred_fallthru
          _
        // Predicated region
        $region45: #{tpu_custom_call.1} parent=39 // pred_check
          %p280 = pneg %p82
        $region46: #{tpu_custom_call.1} parent=39 // pred_check_branch
          %282 = sbr.rel (%p280) target = $region48
        $region47: #{tpu_custom_call.1} parent=39 // pred_region
          %283 = dma.done [#allocation6], 4096
        $region48: #{tpu_custom_call.1} parent=39 // pred_fallthru
          _
        // Predicated region
        $region49: #{tpu_custom_call.1} parent=39 // pred_check
          %p284 = pneg %p134
        $region50: #{tpu_custom_call.1} parent=39 // pred_check_branch
          %286 = sbr.rel (%p284) target = $region52
        $region51: #{tpu_custom_call.1} parent=39 // pred_region
          %287 = dma.done [#allocation6], 4096
        $region52: #{tpu_custom_call.1} parent=39 // pred_fallthru
          _
        %s288 = sand.u32 %s43, 1
        %s289 = scalar_lea.sflag [#allocation3], %s288
        %s290 = sand.u32 %s43, 1
        %s291 = smul.addr %s290, 128
        %s292 = scalar_lea.vmem [#allocation2], %s291
        %p293 = pneg %p56
        %p294 = pneg %p53
        %p295 = pneg %p82
        %p296 = pneg %p79
        %s297 = smul.u32 2, %s28
        %p298 = scmp.lt.s32.totalorder %s297, 1
        %s299 = scalar_select %p298, %s297, 1
        %s300 = scalar_lea.vmem %s2, %s299
        %p301 = pneg %p108
        %p302 = pneg %p105
        %p303 = pneg %p134
        %p304 = pneg %p131
        %p305 = pneg %p155
        %p306 = pneg %p152
        %p307 = pneg %p181
        %p308 = pneg %p178
        %s309 = sand.u32 %s168, 1
        %s310 = scalar_lea.sflag [#allocation4], %s309
        %s311 = sand.u32 %s168, 1
        %s312 = smul.addr %s311, 128
        %s313 = scalar_lea.vmem [#allocation8], %s312
        %s314 = smul.u32 16, %s27
        %s315 = smul.u32 2, %s28
        %s316 = smul.u32 2, %s28
        %p317 = scmp.lt.s32.totalorder %s316, 1
        %s318 = scalar_select %p317, %s316, 1
        %s319 = scalar_lea.vmem %s2, %s318
        %s320 = smul.u32 2, %s28
        %s321 = smul.u32 32, %s28
        %s322 = smul.u32 16, %s27
        %p323 = scmp.eq.s32.totalorder %s28, 0
        // Predicated region
        $region53: #{tpu_custom_call.1} parent=39 // pred_check
          %p324 = pneg %p323
        $region54: #{tpu_custom_call.1} parent=39 // pred_check_branch
          %326 = sbr.rel (%p324) target = $region56
        $region55: #{tpu_custom_call.1} parent=39 // pred_region
          %v327 = vld [vmem:[%s4] sm:$0x1]
          %v329 = vlaneseq
          %v330 = vshrl.u32 %v329, 7
          %v331 = vsub.s32 0, %v330
          %v332 = vrot.slane %v327, %v331
          %334 = vst [vmem:[%s313] sm:$0xff] %v332
          %335 = vst [vmem:[%s313 + $0x8] sm:$0xff] %v332
          %336 = vst [vmem:[%s313 + $0x10] sm:$0xff] %v332
          %337 = vst [vmem:[%s313 + $0x18] sm:$0xff] %v332
          %338 = vst [vmem:[%s313 + $0x20] sm:$0xff] %v332
          %339 = vst [vmem:[%s313 + $0x28] sm:$0xff] %v332
          %340 = vst [vmem:[%s313 + $0x30] sm:$0xff] %v332
          %341 = vst [vmem:[%s313 + $0x38] sm:$0xff] %v332
          %342 = vst [vmem:[%s313 + $0x40] sm:$0xff] %v332
          %343 = vst [vmem:[%s313 + $0x48] sm:$0xff] %v332
          %344 = vst [vmem:[%s313 + $0x50] sm:$0xff] %v332
          %345 = vst [vmem:[%s313 + $0x58] sm:$0xff] %v332
          %346 = vst [vmem:[%s313 + $0x60] sm:$0xff] %v332
          %347 = vst [vmem:[%s313 + $0x68] sm:$0xff] %v332
          %348 = vst [vmem:[%s313 + $0x70] sm:$0xff] %v332
          %349 = vst [vmem:[%s313 + $0x78] sm:$0xff] %v332
        $region56: #{tpu_custom_call.1} parent=39 // pred_fallthru
          _
        %v350 = vld [vmem:[%s275] sm:$0xff]
        %v351 = vld [vmem:[%s275 + $0x8] sm:$0xff]
        %v352 = vld [vmem:[%s275 + $0x10] sm:$0xff]
        %v353 = vld [vmem:[%s275 + $0x18] sm:$0xff]
        %v354 = vld [vmem:[%s275 + $0x20] sm:$0xff]
        %v355 = vld [vmem:[%s275 + $0x28] sm:$0xff]
        %v356 = vld [vmem:[%s275 + $0x30] sm:$0xff]
        %v357 = vld [vmem:[%s275 + $0x38] sm:$0xff]
        %v358 = vld [vmem:[%s275 + $0x40] sm:$0xff]
        %v359 = vld [vmem:[%s275 + $0x48] sm:$0xff]
        %v360 = vld [vmem:[%s275 + $0x50] sm:$0xff]
        %v361 = vld [vmem:[%s275 + $0x58] sm:$0xff]
        %v362 = vld [vmem:[%s275 + $0x60] sm:$0xff]
        %v363 = vld [vmem:[%s275 + $0x68] sm:$0xff]
        %v364 = vld [vmem:[%s275 + $0x70] sm:$0xff]
        %v365 = vld [vmem:[%s275 + $0x78] sm:$0xff]
        %v366 = vld [vmem:[#allocation5] sm:$0xff]
        %v367 = vld [vmem:[#allocation5 + $0x8] sm:$0xff]
        %v368 = vld [vmem:[#allocation5 + $0x10] sm:$0xff]
        %v369 = vld [vmem:[#allocation5 + $0x18] sm:$0xff]
        %v370 = vld [vmem:[#allocation5 + $0x20] sm:$0xff]
        %v371 = vld [vmem:[#allocation5 + $0x28] sm:$0xff]
        %v372 = vld [vmem:[#allocation5 + $0x30] sm:$0xff]
        %v373 = vld [vmem:[#allocation5 + $0x38] sm:$0xff]
        %v374 = vld [vmem:[#allocation5 + $0x40] sm:$0xff]
        %v375 = vld [vmem:[#allocation5 + $0x48] sm:$0xff]
        %v376 = vld [vmem:[#allocation5 + $0x50] sm:$0xff]
        %v377 = vld [vmem:[#allocation5 + $0x58] sm:$0xff]
        %v378 = vld [vmem:[#allocation5 + $0x60] sm:$0xff]
        %v379 = vld [vmem:[#allocation5 + $0x68] sm:$0xff]
        %v380 = vld [vmem:[#allocation5 + $0x70] sm:$0xff]
        %v381 = vld [vmem:[#allocation5 + $0x78] sm:$0xff]
        %v382 = vld [vmem:[#allocation5 + $0x80] sm:$0xff]
        %v383 = vld [vmem:[#allocation5 + $0x88] sm:$0xff]
        %v384 = vld [vmem:[#allocation5 + $0x90] sm:$0xff]
        %v385 = vld [vmem:[#allocation5 + $0x98] sm:$0xff]
        %v386 = vld [vmem:[#allocation5 + $0xa0] sm:$0xff]
        %v387 = vld [vmem:[#allocation5 + $0xa8] sm:$0xff]
        %v388 = vld [vmem:[#allocation5 + $0xb0] sm:$0xff]
        %v389 = vld [vmem:[#allocation5 + $0xb8] sm:$0xff]
        %v390 = vld [vmem:[#allocation5 + $0xc0] sm:$0xff]
        %v391 = vld [vmem:[#allocation5 + $0xc8] sm:$0xff]
        %v392 = vld [vmem:[#allocation5 + $0xd0] sm:$0xff]
        %v393 = vld [vmem:[#allocation5 + $0xd8] sm:$0xff]
        %v394 = vld [vmem:[#allocation5 + $0xe0] sm:$0xff]
        %v395 = vld [vmem:[#allocation5 + $0xe8] sm:$0xff]
        %v396 = vld [vmem:[#allocation5 + $0xf0] sm:$0xff]
        %v397 = vld [vmem:[#allocation5 + $0xf8] sm:$0xff]
        %v398 = vld [vmem:[%s319] sm:$0x3]
        %v400 = vlaneseq
        %v401 = vshrl.u32 %v400, 7
        %v402 = vsub.s32 0, %v401
        %v403 = vrot.slane %v398, %v402
        %v404 = vlaneseq
        %v405 = vshrl.u32 %v404, 7
        %v406 = vsub.s32 1, %v405
        %v407 = vrot.slane %v398, %v406
        %410 = vmatprep.subr.mxu0 %v367
        %411 = vmatpush1.msra.mxu0 %v366
        %412 = vmatprep.subr.mxu0 %v369
        %413 = vmatpush1.msra.mxu0 %v368
        %414 = vmatprep.subr.mxu0 %v371
        %415 = vmatpush1.msra.mxu0 %v370
        %416 = vmatprep.subr.mxu0 %v373
        %417 = vmatpush1.msra.mxu0 %v372
        %418 = vmatprep.subr.mxu0 %v375
        %419 = vmatpush1.msra.mxu0 %v374
        %420 = vmatprep.subr.mxu0 %v377
        %421 = vmatpush1.msra.mxu0 %v376
        %422 = vmatprep.subr.mxu0 %v379
        %423 = vmatpush1.msra.mxu0 %v378
        %424 = vmatprep.subr.mxu0 %v381
        %425 = vmatpush1.msra.mxu0 %v380
        %426 = vmatprep.subr.mxu0 %v383
        %427 = vmatpush1.msra.mxu0 %v382
        %428 = vmatprep.subr.mxu0 %v385
        %429 = vmatpush1.msra.mxu0 %v384
        %430 = vmatprep.subr.mxu0 %v387
        %431 = vmatpush1.msra.mxu0 %v386
        %432 = vmatprep.subr.mxu0 %v389
        %433 = vmatpush1.msra.mxu0 %v388
        %434 = vmatprep.subr.mxu0 %v391
        %435 = vmatpush1.msra.mxu0 %v390
        %436 = vmatprep.subr.mxu0 %v393
        %437 = vmatpush1.msra.mxu0 %v392
        %438 = vmatprep.subr.mxu0 %v395
        %439 = vmatpush1.msra.mxu0 %v394
        %440 = vmatprep.subr.mxu0 %v397
        %441 = vmatpush1.msra.mxu0 %v396
        %442 = vmatprep.subr.mxu0 0.0
        %443 = vmatpush1.msra.mxu0 0.0
        %444 = vmatprep.subr.mxu0 0.0
        %445 = vmatpush1.msra.mxu0 0.0
        %446 = vmatprep.subr.mxu0 0.0
        %447 = vmatpush1.msra.mxu0 0.0
        %448 = vmatprep.subr.mxu0 0.0
        %449 = vmatpush1.msra.mxu0 0.0
        %450 = vmatprep.subr.mxu0 0.0
        %451 = vmatpush1.msra.mxu0 0.0
        %452 = vmatprep.subr.mxu0 0.0
        %453 = vmatpush1.msra.mxu0 0.0
        %454 = vmatprep.subr.mxu0 0.0
        %455 = vmatpush1.msra.mxu0 0.0
        %456 = vmatprep.subr.mxu0 0.0
        %457 = vmatpush1.msra.mxu0 0.0
        %458 = vmatprep.subr.mxu0 0.0
        %459 = vmatpush1.msra.mxu0 0.0
        %460 = vmatprep.subr.mxu0 0.0
        %461 = vmatpush1.msra.mxu0 0.0
        %462 = vmatprep.subr.mxu0 0.0
        %463 = vmatpush1.msra.mxu0 0.0
        %464 = vmatprep.subr.mxu0 0.0
        %465 = vmatpush1.msra.mxu0 0.0
        %466 = vmatprep.subr.mxu0 0.0
        %467 = vmatpush1.msra.mxu0 0.0
        %468 = vmatprep.subr.mxu0 0.0
        %469 = vmatpush1.msra.mxu0 0.0
        %470 = vmatprep.subr.mxu0 0.0
        %471 = vmatpush1.msra.mxu0 0.0
        %472 = vmatprep.subr.mxu0 0.0
        %473 = vmatpush1.msra.mxu0 0.0
        %474 = vmatprep.mubr.f32.mxu0 0.0
        %475 = vmatmul.mubr.f32.gmra.mrb[0].mxu0 %v350
        %v476 = vpop.f32.mrb[0].mxu0
        %v477 = vadd.f32 %v403, %v476
        %v478 = vpop.f32.mrb[0].mxu0
        %v479 = vadd.f32 %v407, %v478
        %480 = vmatprep.mubr.f32.mxu0 0.0
        %481 = vmatmul.mubr.f32.gmra.mrb[0].mxu0 %v351
        %v482 = vpop.f32.mrb[0].mxu0
        %v483 = vadd.f32 %v403, %v482
        %v484 = vpop.f32.mrb[0].mxu0
        %v485 = vadd.f32 %v407, %v484
        %486 = vmatprep.mubr.f32.mxu0 0.0
        %487 = vmatmul.mubr.f32.gmra.mrb[0].mxu0 %v352
        %v488 = vpop.f32.mrb[0].mxu0
        %v489 = vadd.f32 %v403, %v488
        %v490 = vpop.f32.mrb[0].mxu0
        %v491 = vadd.f32 %v407, %v490
        %492 = vmatprep.mubr.f32.mxu0 0.0
        %493 = vmatmul.mubr.f32.gmra.mrb[0].mxu0 %v353
        %v494 = vpop.f32.mrb[0].mxu0
        %v495 = vadd.f32 %v403, %v494
        %v496 = vpop.f32.mrb[0].mxu0
        %v497 = vadd.f32 %v407, %v496
        %498 = vmatprep.mubr.f32.mxu0 0.0
        %499 = vmatmul.mubr.f32.gmra.mrb[0].mxu0 %v354
        %v500 = vpop.f32.mrb[0].mxu0
        %v501 = vadd.f32 %v403, %v500
        %v502 = vpop.f32.mrb[0].mxu0
        %v503 = vadd.f32 %v407, %v502
        %504 = vmatprep.mubr.f32.mxu0 0.0
        %505 = vmatmul.mubr.f32.gmra.mrb[0].mxu0 %v355
        %v506 = vpop.f32.mrb[0].mxu0
        %v507 = vadd.f32 %v403, %v506
        %v508 = vpop.f32.mrb[0].mxu0
        %v509 = vadd.f32 %v407, %v508
        %510 = vmatprep.mubr.f32.mxu0 0.0
        %511 = vmatmul.mubr.f32.gmra.mrb[0].mxu0 %v356
        %v512 = vpop.f32.mrb[0].mxu0
        %v513 = vadd.f32 %v403, %v512
        %v514 = vpop.f32.mrb[0].mxu0
        %v515 = vadd.f32 %v407, %v514
        %516 = vmatprep.mubr.f32.mxu0 0.0
        %517 = vmatmul.mubr.f32.gmra.mrb[0].mxu0 %v357
        %v518 = vpop.f32.mrb[0].mxu0
        %v519 = vadd.f32 %v403, %v518
        %v520 = vpop.f32.mrb[0].mxu0
        %v521 = vadd.f32 %v407, %v520
        %522 = vmatprep.mubr.f32.mxu0 0.0
        %523 = vmatmul.mubr.f32.gmra.mrb[0].mxu0 %v358
        %v524 = vpop.f32.mrb[0].mxu0
        %v525 = vadd.f32 %v403, %v524
        %v526 = vpop.f32.mrb[0].mxu0
        %v527 = vadd.f32 %v407, %v526
        %528 = vmatprep.mubr.f32.mxu0 0.0
        %529 = vmatmul.mubr.f32.gmra.mrb[0].mxu0 %v359
        %v530 = vpop.f32.mrb[0].mxu0
        %v531 = vadd.f32 %v403, %v530
        %v532 = vpop.f32.mrb[0].mxu0
        %v533 = vadd.f32 %v407, %v532
        %534 = vmatprep.mubr.f32.mxu0 0.0
        %535 = vmatmul.mubr.f32.gmra.mrb[0].mxu0 %v360
        %v536 = vpop.f32.mrb[0].mxu0
        %v537 = vadd.f32 %v403, %v536
        %v538 = vpop.f32.mrb[0].mxu0
        %v539 = vadd.f32 %v407, %v538
        %540 = vmatprep.mubr.f32.mxu0 0.0
        %541 = vmatmul.mubr.f32.gmra.mrb[0].mxu0 %v361
        %v542 = vpop.f32.mrb[0].mxu0
        %v543 = vadd.f32 %v403, %v542
        %v544 = vpop.f32.mrb[0].mxu0
        %v545 = vadd.f32 %v407, %v544
        %546 = vmatprep.mubr.f32.mxu0 0.0
        %547 = vmatmul.mubr.f32.gmra.mrb[0].mxu0 %v362
        %v548 = vpop.f32.mrb[0].mxu0
        %v549 = vadd.f32 %v403, %v548
        %v550 = vpop.f32.mrb[0].mxu0
        %v551 = vadd.f32 %v407, %v550
        %552 = vmatprep.mubr.f32.mxu0 0.0
        %553 = vmatmul.mubr.f32.gmra.mrb[0].mxu0 %v363
        %v554 = vpop.f32.mrb[0].mxu0
        %v555 = vadd.f32 %v403, %v554
        %v556 = vpop.f32.mrb[0].mxu0
        %v557 = vadd.f32 %v407, %v556
        %558 = vmatprep.mubr.f32.mxu0 0.0
        %559 = vmatmul.mubr.f32.gmra.mrb[0].mxu0 %v364
        %v560 = vpop.f32.mrb[0].mxu0
        %v561 = vadd.f32 %v403, %v560
        %v562 = vpop.f32.mrb[0].mxu0
        %v563 = vadd.f32 %v407, %v562
        %564 = vmatprep.mubr.f32.mxu0 0.0
        %565 = vmatmul.mubr.f32.gmra.mrb[0].mxu0 %v365
        %v566 = vpop.f32.mrb[0].mxu0
        %v567 = vadd.f32 %v403, %v566
        %v568 = vpop.f32.mrb[0].mxu0
        %v569 = vadd.f32 %v407, %v568
        %570 = vdwg.mxu0
        %v571 = vtanh.pop %v477
        %v572 = vtanh.pop %v479
        %v573 = vtanh.pop %v483
        %v574 = vtanh.pop %v485
        %v575 = vtanh.pop %v489
        %v576 = vtanh.pop %v491
        %v577 = vtanh.pop %v495
        %v578 = vtanh.pop %v497
        %v579 = vtanh.pop %v501
        %v580 = vtanh.pop %v503
        %v581 = vtanh.pop %v507
        %v582 = vtanh.pop %v509
        %v583 = vtanh.pop %v513
        %v584 = vtanh.pop %v515
        %v585 = vtanh.pop %v519
        %v586 = vtanh.pop %v521
        %v587 = vtanh.pop %v525
        %v588 = vtanh.pop %v527
        %v589 = vtanh.pop %v531
        %v590 = vtanh.pop %v533
        %v591 = vtanh.pop %v537
        %v592 = vtanh.pop %v539
        %v593 = vtanh.pop %v543
        %v594 = vtanh.pop %v545
        %v595 = vtanh.pop %v549
        %v596 = vtanh.pop %v551
        %v597 = vtanh.pop %v555
        %v598 = vtanh.pop %v557
        %v599 = vtanh.pop %v561
        %v600 = vtanh.pop %v563
        %v601 = vtanh.pop %v567
        %v602 = vtanh.pop %v569
        %v603 = vld [vmem:[%s313] sm:$0xff]
        %v604 = vld [vmem:[%s313 + $0x8] sm:$0xff]
        %v605 = vld [vmem:[%s313 + $0x10] sm:$0xff]
        %v606 = vld [vmem:[%s313 + $0x18] sm:$0xff]
        %v607 = vld [vmem:[%s313 + $0x20] sm:$0xff]
        %v608 = vld [vmem:[%s313 + $0x28] sm:$0xff]
        %v609 = vld [vmem:[%s313 + $0x30] sm:$0xff]
        %v610 = vld [vmem:[%s313 + $0x38] sm:$0xff]
        %v611 = vld [vmem:[%s313 + $0x40] sm:$0xff]
        %v612 = vld [vmem:[%s313 + $0x48] sm:$0xff]
        %v613 = vld [vmem:[%s313 + $0x50] sm:$0xff]
        %v614 = vld [vmem:[%s313 + $0x58] sm:$0xff]
        %v615 = vld [vmem:[%s313 + $0x60] sm:$0xff]
        %v616 = vld [vmem:[%s313 + $0x68] sm:$0xff]
        %v617 = vld [vmem:[%s313 + $0x70] sm:$0xff]
        %v618 = vld [vmem:[%s313 + $0x78] sm:$0xff]
        %v619 = vld [vmem:[#allocation7] sm:$0xff]
        %v620 = vld [vmem:[#allocation7 + $0x8] sm:$0xff]
        %v621 = vld [vmem:[#allocation7 + $0x10] sm:$0xff]
        %v622 = vld [vmem:[#allocation7 + $0x18] sm:$0xff]
        %v623 = vld [vmem:[#allocation7 + $0x20] sm:$0xff]
        %v624 = vld [vmem:[#allocation7 + $0x28] sm:$0xff]
        %v625 = vld [vmem:[#allocation7 + $0x30] sm:$0xff]
        %v626 = vld [vmem:[#allocation7 + $0x38] sm:$0xff]
        %v627 = vld [vmem:[#allocation7 + $0x40] sm:$0xff]
        %v628 = vld [vmem:[#allocation7 + $0x48] sm:$0xff]
        %v629 = vld [vmem:[#allocation7 + $0x50] sm:$0xff]
        %v630 = vld [vmem:[#allocation7 + $0x58] sm:$0xff]
        %v631 = vld [vmem:[#allocation7 + $0x60] sm:$0xff]
        %v632 = vld [vmem:[#allocation7 + $0x68] sm:$0xff]
        %v633 = vld [vmem:[#allocation7 + $0x70] sm:$0xff]
        %v634 = vld [vmem:[#allocation7 + $0x78] sm:$0xff]
        %v635 = vld [vmem:[#allocation7 + $0x80] sm:$0xff]
        %v636 = vld [vmem:[#allocation7 + $0x88] sm:$0xff]
        %v637 = vld [vmem:[#allocation7 + $0x90] sm:$0xff]
        %v638 = vld [vmem:[#allocation7 + $0x98] sm:$0xff]
        %v639 = vld [vmem:[#allocation7 + $0xa0] sm:$0xff]
        %v640 = vld [vmem:[#allocation7 + $0xa8] sm:$0xff]
        %v641 = vld [vmem:[#allocation7 + $0xb0] sm:$0xff]
        %v642 = vld [vmem:[#allocation7 + $0xb8] sm:$0xff]
        %v643 = vld [vmem:[#allocation7 + $0xc0] sm:$0xff]
        %v644 = vld [vmem:[#allocation7 + $0xc8] sm:$0xff]
        %v645 = vld [vmem:[#allocation7 + $0xd0] sm:$0xff]
        %v646 = vld [vmem:[#allocation7 + $0xd8] sm:$0xff]
        %v647 = vld [vmem:[#allocation7 + $0xe0] sm:$0xff]
        %v648 = vld [vmem:[#allocation7 + $0xe8] sm:$0xff]
        %v649 = vld [vmem:[#allocation7 + $0xf0] sm:$0xff]
        %v650 = vld [vmem:[#allocation7 + $0xf8] sm:$0xff]
        %651 = vmatprep.subr.mxu0 0.0
        %652 = vmatpush1.msra.mxu0 %v619
        %653 = vmatprep.subr.mxu0 0.0
        %654 = vmatpush1.msra.mxu0 %v620
        %655 = vmatprep.subr.mxu0 0.0
        %656 = vmatpush1.msra.mxu0 %v621
        %657 = vmatprep.subr.mxu0 0.0
        %658 = vmatpush1.msra.mxu0 %v622
        %659 = vmatprep.subr.mxu0 0.0
        %660 = vmatpush1.msra.mxu0 %v623
        %661 = vmatprep.subr.mxu0 0.0
        %662 = vmatpush1.msra.mxu0 %v624
        %663 = vmatprep.subr.mxu0 0.0
        %664 = vmatpush1.msra.mxu0 %v625
        %665 = vmatprep.subr.mxu0 0.0
        %666 = vmatpush1.msra.mxu0 %v626
        %667 = vmatprep.subr.mxu0 0.0
        %668 = vmatpush1.msra.mxu0 %v627
        %669 = vmatprep.subr.mxu0 0.0
        %670 = vmatpush1.msra.mxu0 %v628
        %671 = vmatprep.subr.mxu0 0.0
        %672 = vmatpush1.msra.mxu0 %v629
        %673 = vmatprep.subr.mxu0 0.0
        %674 = vmatpush1.msra.mxu0 %v630
        %675 = vmatprep.subr.mxu0 0.0
        %676 = vmatpush1.msra.mxu0 %v631
        %677 = vmatprep.subr.mxu0 0.0
        %678 = vmatpush1.msra.mxu0 %v632
        %679 = vmatprep.subr.mxu0 0.0
        %680 = vmatpush1.msra.mxu0 %v633
        %681 = vmatprep.subr.mxu0 0.0
        %682 = vmatpush1.msra.mxu0 %v634
        %683 = vmatprep.subr.mxu0 0.0
        %684 = vmatpush1.msra.mxu0 %v635
        %685 = vmatprep.subr.mxu0 0.0
        %686 = vmatpush1.msra.mxu0 %v636
        %687 = vmatprep.subr.mxu0 0.0
        %688 = vmatpush1.msra.mxu0 %v637
        %689 = vmatprep.subr.mxu0 0.0
        %690 = vmatpush1.msra.mxu0 %v638
        %691 = vmatprep.subr.mxu0 0.0
        %692 = vmatpush1.msra.mxu0 %v639
        %693 = vmatprep.subr.mxu0 0.0
        %694 = vmatpush1.msra.mxu0 %v640
        %695 = vmatprep.subr.mxu0 0.0
        %696 = vmatpush1.msra.mxu0 %v641
        %697 = vmatprep.subr.mxu0 0.0
        %698 = vmatpush1.msra.mxu0 %v642
        %699 = vmatprep.subr.mxu0 0.0
        %700 = vmatpush1.msra.mxu0 %v643
        %701 = vmatprep.subr.mxu0 0.0
        %702 = vmatpush1.msra.mxu0 %v644
        %703 = vmatprep.subr.mxu0 0.0
        %704 = vmatpush1.msra.mxu0 %v645
        %705 = vmatprep.subr.mxu0 0.0
        %706 = vmatpush1.msra.mxu0 %v646
        %707 = vmatprep.subr.mxu0 0.0
        %708 = vmatpush1.msra.mxu0 %v647
        %709 = vmatprep.subr.mxu0 0.0
        %710 = vmatpush1.msra.mxu0 %v648
        %711 = vmatprep.subr.mxu0 0.0
        %712 = vmatpush1.msra.mxu0 %v649
        %713 = vmatprep.subr.mxu0 0.0
        %714 = vmatpush1.msra.mxu0 %v650
        %715 = vmatprep.mubr.f32.mxu0 %v572
        %716 = vmatmul.mubr.f32.gmra.mrb[0].mxu0 %v571
        %v717 = vpop.f32.mrb[0].mxu0
        %v718 = vadd.f32 0.0, %v717
        %v719 = vpop.f32.mrb[0].mxu0
        %720 = vmatprep.mubr.f32.mxu0 %v574
        %721 = vmatmul.mubr.f32.gmra.mrb[0].mxu0 %v573
        %v722 = vpop.f32.mrb[0].mxu0
        %v723 = vadd.f32 0.0, %v722
        %v724 = vpop.f32.mrb[0].mxu0
        %725 = vmatprep.mubr.f32.mxu0 %v576
        %726 = vmatmul.mubr.f32.gmra.mrb[0].mxu0 %v575
        %v727 = vpop.f32.mrb[0].mxu0
        %v728 = vadd.f32 0.0, %v727
        %v729 = vpop.f32.mrb[0].mxu0
        %730 = vmatprep.mubr.f32.mxu0 %v578
        %731 = vmatmul.mubr.f32.gmra.mrb[0].mxu0 %v577
        %v732 = vpop.f32.mrb[0].mxu0
        %v733 = vadd.f32 0.0, %v732
        %v734 = vpop.f32.mrb[0].mxu0
        %735 = vmatprep.mubr.f32.mxu0 %v580
        %736 = vmatmul.mubr.f32.gmra.mrb[0].mxu0 %v579
        %v737 = vpop.f32.mrb[0].mxu0
        %v738 = vadd.f32 0.0, %v737
        %v739 = vpop.f32.mrb[0].mxu0
        %740 = vmatprep.mubr.f32.mxu0 %v582
        %741 = vmatmul.mubr.f32.gmra.mrb[0].mxu0 %v581
        %v742 = vpop.f32.mrb[0].mxu0
        %v743 = vadd.f32 0.0, %v742
        %v744 = vpop.f32.mrb[0].mxu0
        %745 = vmatprep.mubr.f32.mxu0 %v584
        %746 = vmatmul.mubr.f32.gmra.mrb[0].mxu0 %v583
        %v747 = vpop.f32.mrb[0].mxu0
        %v748 = vadd.f32 0.0, %v747
        %v749 = vpop.f32.mrb[0].mxu0
        %750 = vmatprep.mubr.f32.mxu0 %v586
        %751 = vmatmul.mubr.f32.gmra.mrb[0].mxu0 %v585
        %v752 = vpop.f32.mrb[0].mxu0
        %v753 = vadd.f32 0.0, %v752
        %v754 = vpop.f32.mrb[0].mxu0
        %755 = vmatprep.mubr.f32.mxu0 %v588
        %756 = vmatmul.mubr.f32.gmra.mrb[0].mxu0 %v587
        %v757 = vpop.f32.mrb[0].mxu0
        %v758 = vadd.f32 0.0, %v757
        %v759 = vpop.f32.mrb[0].mxu0
        %760 = vmatprep.mubr.f32.mxu0 %v590
        %761 = vmatmul.mubr.f32.gmra.mrb[0].mxu0 %v589
        %v762 = vpop.f32.mrb[0].mxu0
        %v763 = vadd.f32 0.0, %v762
        %v764 = vpop.f32.mrb[0].mxu0
        %765 = vmatprep.mubr.f32.mxu0 %v592
        %766 = vmatmul.mubr.f32.gmra.mrb[0].mxu0 %v591
        %v767 = vpop.f32.mrb[0].mxu0
        %v768 = vadd.f32 0.0, %v767
        %v769 = vpop.f32.mrb[0].mxu0
        %770 = vmatprep.mubr.f32.mxu0 %v594
        %771 = vmatmul.mubr.f32.gmra.mrb[0].mxu0 %v593
        %v772 = vpop.f32.mrb[0].mxu0
        %v773 = vadd.f32 0.0, %v772
        %v774 = vpop.f32.mrb[0].mxu0
        %775 = vmatprep.mubr.f32.mxu0 %v596
        %776 = vmatmul.mubr.f32.gmra.mrb[0].mxu0 %v595
        %v777 = vpop.f32.mrb[0].mxu0
        %v778 = vadd.f32 0.0, %v777
        %v779 = vpop.f32.mrb[0].mxu0
        %780 = vmatprep.mubr.f32.mxu0 %v598
        %781 = vmatmul.mubr.f32.gmra.mrb[0].mxu0 %v597
        %v782 = vpop.f32.mrb[0].mxu0
        %v783 = vadd.f32 0.0, %v782
        %v784 = vpop.f32.mrb[0].mxu0
        %785 = vmatprep.mubr.f32.mxu0 %v600
        %786 = vmatmul.mubr.f32.gmra.mrb[0].mxu0 %v599
        %v787 = vpop.f32.mrb[0].mxu0
        %v788 = vadd.f32 0.0, %v787
        %v789 = vpop.f32.mrb[0].mxu0
        %790 = vmatprep.mubr.f32.mxu0 %v602
        %791 = vmatmul.mubr.f32.gmra.mrb[0].mxu0 %v601
        %v792 = vpop.f32.mrb[0].mxu0
        %v793 = vadd.f32 0.0, %v792
        %v794 = vpop.f32.mrb[0].mxu0
        %795 = vdwg.mxu0
        %v796 = vadd.f32 %v603, %v718
        %v797 = vadd.f32 %v604, %v723
        %v798 = vadd.f32 %v605, %v728
        %v799 = vadd.f32 %v606, %v733
        %v800 = vadd.f32 %v607, %v738
        %v801 = vadd.f32 %v608, %v743
        %v802 = vadd.f32 %v609, %v748
        %v803 = vadd.f32 %v610, %v753
        %v804 = vadd.f32 %v611, %v758
        %v805 = vadd.f32 %v612, %v763
        %v806 = vadd.f32 %v613, %v768
        %v807 = vadd.f32 %v614, %v773
        %v808 = vadd.f32 %v615, %v778
        %v809 = vadd.f32 %v616, %v783
        %v810 = vadd.f32 %v617, %v788
        %v811 = vadd.f32 %v618, %v793
        %812 = vst [vmem:[%s313] sm:$0xff] %v796
        %813 = vst [vmem:[%s313 + $0x8] sm:$0xff] %v797
        %814 = vst [vmem:[%s313 + $0x10] sm:$0xff] %v798
        %815 = vst [vmem:[%s313 + $0x18] sm:$0xff] %v799
        %816 = vst [vmem:[%s313 + $0x20] sm:$0xff] %v800
        %817 = vst [vmem:[%s313 + $0x28] sm:$0xff] %v801
        %818 = vst [vmem:[%s313 + $0x30] sm:$0xff] %v802
        %819 = vst [vmem:[%s313 + $0x38] sm:$0xff] %v803
        %820 = vst [vmem:[%s313 + $0x40] sm:$0xff] %v804
        %821 = vst [vmem:[%s313 + $0x48] sm:$0xff] %v805
        %822 = vst [vmem:[%s313 + $0x50] sm:$0xff] %v806
        %823 = vst [vmem:[%s313 + $0x58] sm:$0xff] %v807
        %824 = vst [vmem:[%s313 + $0x60] sm:$0xff] %v808
        %825 = vst [vmem:[%s313 + $0x68] sm:$0xff] %v809
        %826 = vst [vmem:[%s313 + $0x70] sm:$0xff] %v810
        %827 = vst [vmem:[%s313 + $0x78] sm:$0xff] %v811
        %s828 = sand.u32 %s168, 1
        %s829 = scalar_lea.sflag [#allocation4], %s828
        %s830 = sand.u32 %s168, 1
        %s831 = smul.addr %s830, 128
        %s832 = scalar_lea.vmem [#allocation8], %s831
        // Predicated region
        $region57: #{tpu_custom_call.1} parent=39 // pred_check
          %p833 = pneg %p178
        $region58: #{tpu_custom_call.1} parent=39 // pred_check_branch
          %835 = sbr.rel (%p833) target = $region60
        $region59: #{tpu_custom_call.1} parent=39 // pred_region
          %s836 = smul.u32 16, %s27
          %s838 = ssub.s32 2048, 2048
          %839 = vsyncadd %s829, %s838
          %s840 = smul.addr %s836, 128
          %s841 = scalar_lea.hbm %s5, %s840
          %s842 = sshll.u32 %s832, 4
          %s843 = int_to_ptr.vmem [resolvable:$true] %s842
          %848 = dma.vmem_to_hbm [thread:$0]  %s843, 2048, %s841, %s829, 128, 128, 8
        $region60: #{tpu_custom_call.1} parent=39 // pred_fallthru
          _
      $region40: #{tpu_custom_call.1} parent=5 // pred_fallthru
        _
      %p849 = scmp.le.s32.totalorder 2, %s18
      // Predicated region
      $region61: #{tpu_custom_call.1} parent=5 // pred_check
        %p850 = pneg %p849
      $region62: #{tpu_custom_call.1} parent=5 // pred_check_branch
        %852 = sbr.rel (%p850) target = $region64
      $region63: #{tpu_custom_call.1} parent=5 // pred_region
        %s853 = ssub.s32 %s18, 2
        // Predicated region
        $region65: #{tpu_custom_call.1} parent=63 // pred_check
          %p854 = pneg %p184
        $region66: #{tpu_custom_call.1} parent=63 // pred_check_branch
          %856 = sbr.rel (%p854) target = $region68
        $region67: #{tpu_custom_call.1} parent=63 // pred_region
          %s857 = sand.u32 %s169, 1
          %s858 = scalar_lea.sflag [#allocation4], %s857
          %s859 = sand.u32 %s169, 1
          %s860 = smul.addr %s859, 128
          %s861 = scalar_lea.vmem [#allocation8], %s860
          %862 = dma.done %s858, 2048
        $region68: #{tpu_custom_call.1} parent=63 // pred_fallthru
          _
      $region64: #{tpu_custom_call.1} parent=5 // pred_fallthru
        _
    $region6: #{tpu_custom_call.1} parent=1 // loop_footer
      %s22 = sadd.s32 1, %s18
    $region7: #{tpu_custom_call.1} parent=1 // loop_footer_branch
      %17 = sbr.rel target = $region3
    $region8: #{tpu_custom_call.1} parent=1 // loop_exit
      _
    %863 = vsyncpa [#allocation3], 1
    %s864 = scalar_lea.sflag [#allocation3], 1
    %865 = vsyncpa %s864, 1
    %866 = vsyncpa [#allocation6], 1
    %867 = vsyncpa [#allocation4], 1
    %s868 = scalar_lea.sflag [#allocation4], 1
    %869 = vsyncpa %s868, 1

</llo_original>
